<compile_context>
chip_gen: v7x
topology: tpu7x:2x2x1
jax: 0.10.0
libtpu: 0.0.40
codegen_flags: <defaults>
</compile_context>

<pallas_src>
import functools

import jax
import jax.numpy as jnp
from jax.experimental import pallas as pl
from jax.experimental.pallas import tpu as pltpu

LANE = 128
SUBLANE = 8


def _round_up(n, m):
    return ((n + m - 1) // m) * m


def dqn_kernel(x_ref, w1_ref, b1_ref, w2_ref, b2_ref,
               w3_ref, b3_ref, w4_ref, b4_ref, o_ref):
    # fc1 + relu : bf16 operands on the MXU, f32 accumulate, f32 bias/ReLU (VPU).
    h = jnp.dot(x_ref[...], w1_ref[...], preferred_element_type=jnp.float32)
    h = jnp.maximum(h + b1_ref[...], 0.0)
    # fc2 + relu
    h = jnp.dot(h.astype(jnp.bfloat16), w2_ref[...],
                preferred_element_type=jnp.float32)
    h = jnp.maximum(h + b2_ref[...], 0.0)
    # fc3 + relu
    h = jnp.dot(h.astype(jnp.bfloat16), w3_ref[...],
                preferred_element_type=jnp.float32)
    h = jnp.maximum(h + b3_ref[...], 0.0)
    # fc4 (no activation) -> lane-dense (TB, 128-padded) store
    out = jnp.dot(h.astype(jnp.bfloat16), w4_ref[...],
                  preferred_element_type=jnp.float32)
    o_ref[...] = (out + b4_ref[...]).astype(o_ref.dtype)


def prepare_params(params):
    """One-time prep: cast weights to bf16, pad fc1 rows / fc4 cols to lane width."""
    in_size = params["w1"].shape[0]
    out_size = params["w4"].shape[1]
    in_pad = _round_up(in_size, LANE)
    out_pad = _round_up(out_size, LANE)

    w1 = jnp.pad(params["w1"].astype(jnp.bfloat16),
                 ((0, in_pad - in_size), (0, 0)))
    w4 = jnp.pad(params["w4"].astype(jnp.bfloat16),
                 ((0, 0), (0, out_pad - out_size)))
    b4 = jnp.pad(params["b4"].astype(jnp.float32),
                 ((0, 0), (0, out_pad - out_size)))
    return {
        "w1": w1, "b1": params["b1"].astype(jnp.float32),
        "w2": params["w2"].astype(jnp.bfloat16), "b2": params["b2"].astype(jnp.float32),
        "w3": params["w3"].astype(jnp.bfloat16), "b3": params["b3"].astype(jnp.float32),
        "w4": w4, "b4": b4,
    }


@functools.partial(jax.jit, static_argnames=("output_size", "block_batch"))
def dqn_forward(x, prepared, output_size, block_batch=512):
    """x: (B, input_size) f32. prepared: output of prepare_params."""
    B, in_features = x.shape
    in_pad = prepared["w1"].shape[0]
    out_pad = prepared["w4"].shape[1]

    # Batch tile: up to `block_batch` rows per grid step, multiple of 8 sublanes.
    tb = min(block_batch, _round_up(B, SUBLANE))
    b_pad = _round_up(B, tb)

    xp = jnp.pad(x.astype(jnp.bfloat16),
                 ((0, b_pad - B), (0, in_pad - in_features)))

    def tile_map(i):       # x / output: stream batch tiles
        return (i, 0)

    def resident_map(i):   # weights / biases: same block every step -> stay in VMEM
        return (0, 0)

    in_specs = [pl.BlockSpec((tb, in_pad), tile_map)]
    for name in ("w1", "b1", "w2", "b2", "w3", "b3", "w4", "b4"):
        in_specs.append(pl.BlockSpec(prepared[name].shape, resident_map))

    out = pl.pallas_call(
        dqn_kernel,
        out_shape=jax.ShapeDtypeStruct((b_pad, out_pad), jnp.float32),
        grid=(b_pad // tb,),
        in_specs=in_specs,
        out_specs=pl.BlockSpec((tb, out_pad), tile_map),
        compiler_params=pltpu.CompilerParams(
            dimension_semantics=("parallel",)),
    )(xp,
      prepared["w1"], prepared["b1"],
      prepared["w2"], prepared["b2"],
      prepared["w3"], prepared["b3"],
      prepared["w4"], prepared["b4"])

    return out[:B, :output_size]


# ----------------------- init + reference (pure JAX) ------------------------

def xavier_uniform(key, fan_in, fan_out):
    bound = (6.0 / (fan_in + fan_out)) ** 0.5
    return jax.random.uniform(key, (fan_in, fan_out), jnp.float32, -bound, bound)


def linear_bias(key, fan_in, fan_out):
    # PyTorch nn.Linear default bias init: U(-1/sqrt(fan_in), 1/sqrt(fan_in))
    bound = 1.0 / (fan_in ** 0.5)
    return jax.random.uniform(key, (1, fan_out), jnp.float32, -bound, bound)


def init_params(key, input_size, output_size):
    ks = jax.random.split(key, 8)
    return {
        "w1": xavier_uniform(ks[0], input_size, 256), "b1": linear_bias(ks[1], input_size, 256),
        "w2": xavier_uniform(ks[2], 256, 256),        "b2": linear_bias(ks[3], 256, 256),
        "w3": xavier_uniform(ks[4], 256, 128),        "b3": linear_bias(ks[5], 256, 128),
        "w4": xavier_uniform(ks[6], 128, output_size), "b4": linear_bias(ks[7], 128, output_size),
    }


def reference_forward(x, p):
    # Same numerics as the kernel: bf16 at the dot inputs, f32 accumulation.
    def mm(a, w):
        return jnp.dot(a.astype(jnp.bfloat16), w.astype(jnp.bfloat16),
                       preferred_element_type=jnp.float32)
    h = jnp.maximum(mm(x, p["w1"]) + p["b1"], 0.0)
    h = jnp.maximum(mm(h, p["w2"]) + p["b2"], 0.0)
    h = jnp.maximum(mm(h, p["w3"]) + p["b3"], 0.0)
    return mm(h, p["w4"]) + p["b4"]


if __name__ == "__main__":
    key = jax.random.PRNGKey(0)
    k_x, k_x2, k_p = jax.random.split(key, 3)

    batch, input_size, output_size = 8, 32, 4
    x = jax.random.normal(k_x, (batch, input_size), jnp.float32)
    params = init_params(k_p, input_size, output_size)
    prepared = prepare_params(params)

    # Small-batch call (single grid step).
    out = jax.block_until_ready(dqn_forward(x, prepared, output_size))
    ref = reference_forward(x, params)
    assert out.shape == (batch, output_size)
    assert jnp.allclose(out, ref, atol=2e-2, rtol=2e-2)

    # Multi-tile call: ragged batch (130) with a 64-row batch tile -> grid=(3,),
    # exercises batch padding + VMEM-resident weights across grid steps.
    x2 = jax.random.normal(k_x2, (130, input_size), jnp.float32)
    out2 = jax.block_until_ready(dqn_forward(x2, prepared, output_size, block_batch=64))
    ref2 = reference_forward(x2, params)
    assert out2.shape == (130, output_size)
    assert jnp.allclose(out2, ref2, atol=2e-2, rtol=2e-2)

    print("KERNEL_OK")
</pallas_src>

<mosaic_0001>
module attributes {stable_mosaic.version = 11 : i64} {
  func.func @dqn_kernel(%arg0: i32, %arg1: memref<8x128xbf16, #tpu.memory_space<vmem>>, %arg2: memref<128x256xbf16, #tpu.memory_space<vmem>>, %arg3: memref<1x256xf32, #tpu.memory_space<vmem>>, %arg4: memref<256x256xbf16, #tpu.memory_space<vmem>>, %arg5: memref<1x256xf32, #tpu.memory_space<vmem>>, %arg6: memref<256x128xbf16, #tpu.memory_space<vmem>>, %arg7: memref<1x128xf32, #tpu.memory_space<vmem>>, %arg8: memref<128x128xbf16, #tpu.memory_space<vmem>>, %arg9: memref<1x128xf32, #tpu.memory_space<vmem>>, %arg10: memref<8x128xf32, #tpu.memory_space<vmem>>) attributes {dimension_semantics = [#tpu.dimension_semantics<parallel>], iteration_bounds = array<i64: 1>, scalar_prefetch = 0 : i64, scratch_operands = 0 : i64, tpu.core_type = #tpu.core_type<tc>, window_params = [{transform_indices = @transform_0, window_bounds = array<i64: 8, 128>}, {pipeline_mode = #tpu.pipeline_mode<synchronous>, transform_indices = @transform_1, window_bounds = array<i64: 128, 256>}, {pipeline_mode = #tpu.pipeline_mode<synchronous>, transform_indices = @transform_2, window_bounds = array<i64: 1, 256>}, {pipeline_mode = #tpu.pipeline_mode<synchronous>, transform_indices = @transform_3, window_bounds = array<i64: 256, 256>}, {pipeline_mode = #tpu.pipeline_mode<synchronous>, transform_indices = @transform_4, window_bounds = array<i64: 1, 256>}, {pipeline_mode = #tpu.pipeline_mode<synchronous>, transform_indices = @transform_5, window_bounds = array<i64: 256, 128>}, {pipeline_mode = #tpu.pipeline_mode<synchronous>, transform_indices = @transform_6, window_bounds = array<i64: 1, 128>}, {pipeline_mode = #tpu.pipeline_mode<synchronous>, transform_indices = @transform_7, window_bounds = array<i64: 128, 128>}, {pipeline_mode = #tpu.pipeline_mode<synchronous>, transform_indices = @transform_8, window_bounds = array<i64: 1, 128>}, {transform_indices = @transform_9, window_bounds = array<i64: 8, 128>}]} {
    %c0 = arith.constant 0 : index
    %c0_0 = arith.constant 0 : index
    %0 = vector.load %arg1[%c0, %c0_0] : memref<8x128xbf16, #tpu.memory_space<vmem>>, vector<8x128xbf16>
    %c0_1 = arith.constant 0 : index
    %c0_2 = arith.constant 0 : index
    %1 = vector.load %arg2[%c0_1, %c0_2] : memref<128x256xbf16, #tpu.memory_space<vmem>>, vector<128x256xbf16>
    %cst = arith.constant dense<0.000000e+00> : vector<8x256xf32>
    %2 = tpu.matmul %0, %1, %cst {dimension_numbers = #tpu.dot_dimension_numbers<[1], [0], [0], [1], [0, 0, 1, 1], [], []>} : vector<8x128xbf16>, vector<128x256xbf16>, vector<8x256xf32> -> vector<8x256xf32>
    %c0_3 = arith.constant 0 : index
    %c0_4 = arith.constant 0 : index
    %3 = vector.load %arg3[%c0_3, %c0_4] : memref<1x256xf32, #tpu.memory_space<vmem>>, vector<1x256xf32>
    %4 = vector.broadcast %3 : vector<1x256xf32> to vector<8x256xf32>
    %5 = arith.addf %2, %4 : vector<8x256xf32>
    %cst_5 = arith.constant 0.000000e+00 : f32
    %6 = vector.broadcast %cst_5 : f32 to vector<8x256xf32>
    %7 = arith.maximumf %5, %6 : vector<8x256xf32>
    %8 = arith.truncf %7 : vector<8x256xf32> to vector<8x256xbf16>
    %c0_6 = arith.constant 0 : index
    %c0_7 = arith.constant 0 : index
    %9 = vector.load %arg4[%c0_6, %c0_7] : memref<256x256xbf16, #tpu.memory_space<vmem>>, vector<256x256xbf16>
    %cst_8 = arith.constant dense<0.000000e+00> : vector<8x256xf32>
    %10 = tpu.matmul %8, %9, %cst_8 {dimension_numbers = #tpu.dot_dimension_numbers<[1], [0], [0], [1], [0, 0, 1, 1], [], []>} : vector<8x256xbf16>, vector<256x256xbf16>, vector<8x256xf32> -> vector<8x256xf32>
    %c0_9 = arith.constant 0 : index
    %c0_10 = arith.constant 0 : index
    %11 = vector.load %arg5[%c0_9, %c0_10] : memref<1x256xf32, #tpu.memory_space<vmem>>, vector<1x256xf32>
    %12 = vector.broadcast %11 : vector<1x256xf32> to vector<8x256xf32>
    %13 = arith.addf %10, %12 : vector<8x256xf32>
    %cst_11 = arith.constant 0.000000e+00 : f32
    %14 = vector.broadcast %cst_11 : f32 to vector<8x256xf32>
    %15 = arith.maximumf %13, %14 : vector<8x256xf32>
    %16 = arith.truncf %15 : vector<8x256xf32> to vector<8x256xbf16>
    %c0_12 = arith.constant 0 : index
    %c0_13 = arith.constant 0 : index
    %17 = vector.load %arg6[%c0_12, %c0_13] : memref<256x128xbf16, #tpu.memory_space<vmem>>, vector<256x128xbf16>
    %cst_14 = arith.constant dense<0.000000e+00> : vector<8x128xf32>
    %18 = tpu.matmul %16, %17, %cst_14 {dimension_numbers = #tpu.dot_dimension_numbers<[1], [0], [0], [1], [0, 0, 1, 1], [], []>} : vector<8x256xbf16>, vector<256x128xbf16>, vector<8x128xf32> -> vector<8x128xf32>
    %c0_15 = arith.constant 0 : index
    %c0_16 = arith.constant 0 : index
    %19 = vector.load %arg7[%c0_15, %c0_16] : memref<1x128xf32, #tpu.memory_space<vmem>>, vector<1x128xf32>
    %20 = vector.broadcast %19 : vector<1x128xf32> to vector<8x128xf32>
    %21 = arith.addf %18, %20 : vector<8x128xf32>
    %cst_17 = arith.constant 0.000000e+00 : f32
    %22 = vector.broadcast %cst_17 : f32 to vector<8x128xf32>
    %23 = arith.maximumf %21, %22 : vector<8x128xf32>
    %24 = arith.truncf %23 : vector<8x128xf32> to vector<8x128xbf16>
    %c0_18 = arith.constant 0 : index
    %c0_19 = arith.constant 0 : index
    %25 = vector.load %arg8[%c0_18, %c0_19] : memref<128x128xbf16, #tpu.memory_space<vmem>>, vector<128x128xbf16>
    %cst_20 = arith.constant dense<0.000000e+00> : vector<8x128xf32>
    %26 = tpu.matmul %24, %25, %cst_20 {dimension_numbers = #tpu.dot_dimension_numbers<[1], [0], [0], [1], [0, 0, 1, 1], [], []>} : vector<8x128xbf16>, vector<128x128xbf16>, vector<8x128xf32> -> vector<8x128xf32>
    %c0_21 = arith.constant 0 : index
    %c0_22 = arith.constant 0 : index
    %27 = vector.load %arg9[%c0_21, %c0_22] : memref<1x128xf32, #tpu.memory_space<vmem>>, vector<1x128xf32>
    %28 = vector.broadcast %27 : vector<1x128xf32> to vector<8x128xf32>
    %29 = arith.addf %26, %28 : vector<8x128xf32>
    %c0_23 = arith.constant 0 : index
    %c0_24 = arith.constant 0 : index
    %30 = vector.load %arg10[%c0_23, %c0_24] : memref<8x128xf32, #tpu.memory_space<vmem>>, vector<8x128xf32>
    tpu.vector_store %arg10[%c0_23, %c0_24], %29 {strides = array<i32>} : memref<8x128xf32, #tpu.memory_space<vmem>>, vector<8x128xf32>,
    return
  }
  func.func @transform_0(%arg0: i32) -> (i32, i32) {
    %c0_i32 = arith.constant 0 : i32
    %c0_i32_0 = arith.constant 0 : i32
    return %arg0, %c0_i32 : i32, i32
  }
  func.func @transform_1(%arg0: i32) -> (i32, i32) {
    %c0_i32 = arith.constant 0 : i32
    %c0_i32_0 = arith.constant 0 : i32
    %c0_i32_1 = arith.constant 0 : i32
    return %c0_i32, %c0_i32_0 : i32, i32
  }
  func.func @transform_2(%arg0: i32) -> (i32, i32) {
    %c0_i32 = arith.constant 0 : i32
    %c0_i32_0 = arith.constant 0 : i32
    %c0_i32_1 = arith.constant 0 : i32
    return %c0_i32, %c0_i32_0 : i32, i32
  }
  func.func @transform_3(%arg0: i32) -> (i32, i32) {
    %c0_i32 = arith.constant 0 : i32
    %c0_i32_0 = arith.constant 0 : i32
    %c0_i32_1 = arith.constant 0 : i32
    return %c0_i32, %c0_i32_0 : i32, i32
  }
  func.func @transform_4(%arg0: i32) -> (i32, i32) {
    %c0_i32 = arith.constant 0 : i32
    %c0_i32_0 = arith.constant 0 : i32
    %c0_i32_1 = arith.constant 0 : i32
    return %c0_i32, %c0_i32_0 : i32, i32
  }
  func.func @transform_5(%arg0: i32) -> (i32, i32) {
    %c0_i32 = arith.constant 0 : i32
    %c0_i32_0 = arith.constant 0 : i32
    %c0_i32_1 = arith.constant 0 : i32
    return %c0_i32, %c0_i32_0 : i32, i32
  }
  func.func @transform_6(%arg0: i32) -> (i32, i32) {
    %c0_i32 = arith.constant 0 : i32
    %c0_i32_0 = arith.constant 0 : i32
    %c0_i32_1 = arith.constant 0 : i32
    return %c0_i32, %c0_i32_0 : i32, i32
  }
  func.func @transform_7(%arg0: i32) -> (i32, i32) {
    %c0_i32 = arith.constant 0 : i32
    %c0_i32_0 = arith.constant 0 : i32
    %c0_i32_1 = arith.constant 0 : i32
    return %c0_i32, %c0_i32_0 : i32, i32
  }
  func.func @transform_8(%arg0: i32) -> (i32, i32) {
    %c0_i32 = arith.constant 0 : i32
    %c0_i32_0 = arith.constant 0 : i32
    %c0_i32_1 = arith.constant 0 : i32
    return %c0_i32, %c0_i32_0 : i32, i32
  }
  func.func @transform_9(%arg0: i32) -> (i32, i32) {
    %c0_i32 = arith.constant 0 : i32
    %c0_i32_0 = arith.constant 0 : i32
    return %arg0, %c0_i32 : i32, i32
  }
}

</mosaic_0001>

<llo_original>
// kernel: dqn_forward.1
$region0: #{dqn_forward.1}
  #allocation0 [shape = 'u32[]', space=smem, size = 0x4, offset = 0x4, fixed_abs, tag = 'smem constant byte address 0x4 - core index']
  #allocation1 [shape = 'u32[144,128]{1,0:T(1,128)}', space=vmem, size = 0x12000, scoped, tag = 'internal scratch']
  %s0 = inlined_call_operand.vmem [shape: bf16[8,128], index: 0, kind: input, shape index: {}]
  %s1 = inlined_call_operand.hbm [shape: bf16[128,256], index: 1, kind: input, shape index: {}]
  %s2 = inlined_call_operand.vmem [shape: f32[1,256], index: 2, kind: input, shape index: {}]
  %s3 = inlined_call_operand.hbm [shape: bf16[256,256], index: 3, kind: input, shape index: {}]
  %s4 = inlined_call_operand.vmem [shape: f32[1,256], index: 4, kind: input, shape index: {}]
  %s5 = inlined_call_operand.hbm [shape: bf16[256,128], index: 5, kind: input, shape index: {}]
  %s6 = inlined_call_operand.vmem [shape: f32[1,128], index: 6, kind: input, shape index: {}]
  %s7 = inlined_call_operand.hbm [shape: bf16[128,128], index: 7, kind: input, shape index: {}]
  %s8 = inlined_call_operand.vmem [shape: f32[1,128], index: 8, kind: input, shape index: {}]
  %s9 = inlined_call_operand.vmem [shape: f32[8,128], index: 9, kind: output, shape index: {}]
  %s10 = sld [smem:[#allocation0]]
  $region62: #{dqn_forward.1} parent=0
    _
  %s12 = ssub.s32 1, %s10
  %s13 = scalar_select 0, %s12, %s10
  $region1: #{dqn_forward.1} parent=0
    #allocation2 [shape = 'u8[65536]{0}', space=vmem, size = 0x10000, scoped, tag = 'input window, operand 1, single buffered']
    #allocation3 [shape = 's32[1]{0}', space=sflag, size = 0x4, scoped, tag = 'scoped memory for dqn_forward.1']
    #allocation4 [shape = 'u8[131072]{0}', space=vmem, size = 0x20000, scoped, tag = 'input window, operand 3, single buffered']
    #allocation5 [shape = 's32[1]{0}', space=sflag, size = 0x4, scoped, tag = 'scoped memory for dqn_forward.1']
    #allocation6 [shape = 'u8[65536]{0}', space=vmem, size = 0x10000, scoped, tag = 'input window, operand 5, single buffered']
    #allocation7 [shape = 'u8[32768]{0}', space=vmem, size = 0x8000, scoped, tag = 'input window, operand 7, single buffered']
    #allocation8 [shape = 's32[1]{0}', space=sflag, size = 0x4, scoped, tag = 'scoped memory for dqn_forward.1']
    %14 = vsyncpa [#allocation3], 0
    %15 = vsyncpa [#allocation5], 0
    %16 = vsyncpa [#allocation8], 0
    // Predicated region
    $region2: #{dqn_forward.1} parent=1 // pred_check
      _
    $region3: #{dqn_forward.1} parent=1 // pred_check_branch
      %18 = sbr.rel (0) target = $region5
    $region4: #{dqn_forward.1} parent=1 // pred_region
      _
    $region5: #{dqn_forward.1} parent=1 // pred_fallthru
      _
    // Predicated region
    $region6: #{dqn_forward.1} parent=1 // pred_check
      _
    $region7: #{dqn_forward.1} parent=1 // pred_check_branch
      %20 = sbr.rel (0) target = $region9
    $region8: #{dqn_forward.1} parent=1 // pred_region
      %s22 = ssub.s32 2048, 2048
      %23 = vsyncadd [#allocation3], %s22
      %s24 = sshll.u32 [#allocation2], 4
      %s25 = int_to_ptr.vmem [resolvable:$true] %s24
      %30 = dma.hbm_to_vmem [thread:$0]  %s1, 2048, %s25, [#allocation3], 128, 128, 8
    $region9: #{dqn_forward.1} parent=1 // pred_fallthru
      _
    // Predicated region
    $region10: #{dqn_forward.1} parent=1 // pred_check
      _
    $region11: #{dqn_forward.1} parent=1 // pred_check_branch
      %32 = sbr.rel (0) target = $region13
    $region12: #{dqn_forward.1} parent=1 // pred_region
      _
    $region13: #{dqn_forward.1} parent=1 // pred_fallthru
      _
    // Predicated region
    $region14: #{dqn_forward.1} parent=1 // pred_check
      _
    $region15: #{dqn_forward.1} parent=1 // pred_check_branch
      %34 = sbr.rel (0) target = $region17
    $region16: #{dqn_forward.1} parent=1 // pred_region
      %s36 = ssub.s32 4096, 4096
      %37 = vsyncadd [#allocation5], %s36
      %s38 = sshll.u32 [#allocation4], 4
      %s39 = int_to_ptr.vmem [resolvable:$true] %s38
      %44 = dma.hbm_to_vmem [thread:$0]  %s3, 4096, %s39, [#allocation5], 128, 128, 8
    $region17: #{dqn_forward.1} parent=1 // pred_fallthru
      _
    // Predicated region
    $region18: #{dqn_forward.1} parent=1 // pred_check
      _
    $region19: #{dqn_forward.1} parent=1 // pred_check_branch
      %46 = sbr.rel (0) target = $region21
    $region20: #{dqn_forward.1} parent=1 // pred_region
      _
    $region21: #{dqn_forward.1} parent=1 // pred_fallthru
      _
    // Predicated region
    $region22: #{dqn_forward.1} parent=1 // pred_check
      _
    $region23: #{dqn_forward.1} parent=1 // pred_check_branch
      %48 = sbr.rel (0) target = $region25
    $region24: #{dqn_forward.1} parent=1 // pred_region
      %s50 = ssub.s32 2048, 2048
      %51 = vsyncadd [#allocation5], %s50
      %s52 = sshll.u32 [#allocation6], 4
      %s53 = int_to_ptr.vmem [resolvable:$true] %s52
      %58 = dma.hbm_to_vmem [thread:$0]  %s5, 2048, %s53, [#allocation5], 64, 64, 4
    $region25: #{dqn_forward.1} parent=1 // pred_fallthru
      _
    // Predicated region
    $region26: #{dqn_forward.1} parent=1 // pred_check
      _
    $region27: #{dqn_forward.1} parent=1 // pred_check_branch
      %60 = sbr.rel (0) target = $region29
    $region28: #{dqn_forward.1} parent=1 // pred_region
      _
    $region29: #{dqn_forward.1} parent=1 // pred_fallthru
      _
    // Predicated region
    $region30: #{dqn_forward.1} parent=1 // pred_check
      _
    $region31: #{dqn_forward.1} parent=1 // pred_check_branch
      %62 = sbr.rel (0) target = $region33
    $region32: #{dqn_forward.1} parent=1 // pred_region
      %s64 = ssub.s32 1024, 1024
      %65 = vsyncadd [#allocation8], %s64
      %s66 = sshll.u32 [#allocation7], 4
      %s67 = int_to_ptr.vmem [resolvable:$true] %s66
      %72 = dma.hbm_to_vmem [thread:$0]  %s7, 1024, %s67, [#allocation8], 64, 64, 4
    $region33: #{dqn_forward.1} parent=1 // pred_fallthru
      _
    // Predicated region
    $region34: #{dqn_forward.1} parent=1 // pred_check
      _
    $region35: #{dqn_forward.1} parent=1 // pred_check_branch
      %74 = sbr.rel (0) target = $region37
    $region36: #{dqn_forward.1} parent=1 // pred_region
      _
    $region37: #{dqn_forward.1} parent=1 // pred_fallthru
      _
    // Predicated region
    $region38: #{dqn_forward.1} parent=1 // pred_check
      _
    $region39: #{dqn_forward.1} parent=1 // pred_check_branch
      %76 = sbr.rel (0) target = $region41
    $region40: #{dqn_forward.1} parent=1 // pred_region
      %77 = dma.done [#allocation3], 2048
    $region41: #{dqn_forward.1} parent=1 // pred_fallthru
      _
    // Predicated region
    $region42: #{dqn_forward.1} parent=1 // pred_check
      _
    $region43: #{dqn_forward.1} parent=1 // pred_check_branch
      %79 = sbr.rel (0) target = $region45
    $region44: #{dqn_forward.1} parent=1 // pred_region
      %80 = dma.done [#allocation5], 4096
    $region45: #{dqn_forward.1} parent=1 // pred_fallthru
      _
    // Predicated region
    $region46: #{dqn_forward.1} parent=1 // pred_check
      _
    $region47: #{dqn_forward.1} parent=1 // pred_check_branch
      %82 = sbr.rel (0) target = $region49
    $region48: #{dqn_forward.1} parent=1 // pred_region
      %83 = dma.done [#allocation5], 2048
    $region49: #{dqn_forward.1} parent=1 // pred_fallthru
      _
    // Predicated region
    $region50: #{dqn_forward.1} parent=1 // pred_check
      _
    $region51: #{dqn_forward.1} parent=1 // pred_check_branch
      %85 = sbr.rel (0) target = $region53
    $region52: #{dqn_forward.1} parent=1 // pred_region
      %86 = dma.done [#allocation8], 1024
    $region53: #{dqn_forward.1} parent=1 // pred_fallthru
      _
    %v88 = vld [vmem:[%s0] sm:$0xf]
    %v89 = vld [vmem:[#allocation2] sm:$0xff]
    %v90 = vld [vmem:[#allocation2 + $0x8] sm:$0xff]
    %v91 = vld [vmem:[#allocation2 + $0x10] sm:$0xff]
    %v92 = vld [vmem:[#allocation2 + $0x18] sm:$0xff]
    %v93 = vld [vmem:[#allocation2 + $0x20] sm:$0xff]
    %v94 = vld [vmem:[#allocation2 + $0x28] sm:$0xff]
    %v95 = vld [vmem:[#allocation2 + $0x30] sm:$0xff]
    %v96 = vld [vmem:[#allocation2 + $0x38] sm:$0xff]
    %v97 = vld [vmem:[#allocation2 + $0x40] sm:$0xff]
    %v98 = vld [vmem:[#allocation2 + $0x48] sm:$0xff]
    %v99 = vld [vmem:[#allocation2 + $0x50] sm:$0xff]
    %v100 = vld [vmem:[#allocation2 + $0x58] sm:$0xff]
    %v101 = vld [vmem:[#allocation2 + $0x60] sm:$0xff]
    %v102 = vld [vmem:[#allocation2 + $0x68] sm:$0xff]
    %v103 = vld [vmem:[#allocation2 + $0x70] sm:$0xff]
    %v104 = vld [vmem:[#allocation2 + $0x78] sm:$0xff]
    %v105 = vld [vmem:[%s2] sm:$0x3]
    %v107 = vlaneseq
    %v108 = vshrl.u32 %v107, 7
    %v109 = vsub.s32 0, %v108
    %v110 = vrot.slane %v105, %v109
    %v111 = vlaneseq
    %v112 = vshrl.u32 %v111, 7
    %v113 = vsub.s32 1, %v112
    %v114 = vrot.slane %v105, %v113
    %v133 = vunpack.c.l.b16 %v89
    %v134 = vunpack.c.h.b16 %v89
    %v135 = vunpack.c.l.b16 %v90
    %v136 = vunpack.c.h.b16 %v90
    %v137 = vunpack.c.l.b16 %v91
    %v138 = vunpack.c.h.b16 %v91
    %v139 = vunpack.c.l.b16 %v92
    %v140 = vunpack.c.h.b16 %v92
    %v141 = vunpack.c.l.b16 %v93
    %v142 = vunpack.c.h.b16 %v93
    %v143 = vunpack.c.l.b16 %v94
    %v144 = vunpack.c.h.b16 %v94
    %v145 = vunpack.c.l.b16 %v95
    %v146 = vunpack.c.h.b16 %v95
    %v147 = vunpack.c.l.b16 %v96
    %v148 = vunpack.c.h.b16 %v96
    %v149 = vunpack.c.l.b16 %v97
    %v150 = vunpack.c.h.b16 %v97
    %v151 = vunpack.c.l.b16 %v98
    %v152 = vunpack.c.h.b16 %v98
    %v153 = vunpack.c.l.b16 %v99
    %v154 = vunpack.c.h.b16 %v99
    %v155 = vunpack.c.l.b16 %v100
    %v156 = vunpack.c.h.b16 %v100
    %v157 = vunpack.c.l.b16 %v101
    %v158 = vunpack.c.h.b16 %v101
    %v159 = vunpack.c.l.b16 %v102
    %v160 = vunpack.c.h.b16 %v102
    %v161 = vunpack.c.l.b16 %v103
    %v162 = vunpack.c.h.b16 %v103
    %v163 = vunpack.c.l.b16 %v104
    %v164 = vunpack.c.h.b16 %v104
    %v165 = vpack.c.b16 %v135, %v133
    %v166 = vpack.c.b16 %v136, %v134
    %v167 = vpack.c.b16 %v139, %v137
    %v168 = vpack.c.b16 %v140, %v138
    %v169 = vpack.c.b16 %v143, %v141
    %v170 = vpack.c.b16 %v144, %v142
    %v171 = vpack.c.b16 %v147, %v145
    %v172 = vpack.c.b16 %v148, %v146
    %v173 = vpack.c.b16 %v151, %v149
    %v174 = vpack.c.b16 %v152, %v150
    %v175 = vpack.c.b16 %v155, %v153
    %v176 = vpack.c.b16 %v156, %v154
    %v177 = vpack.c.b16 %v159, %v157
    %v178 = vpack.c.b16 %v160, %v158
    %v179 = vpack.c.b16 %v163, %v161
    %v180 = vpack.c.b16 %v164, %v162
    %197 = vmatprep.subr.bf16.mxu0 %v166
    %198 = vmatpush1.bf16.msra.mxu0 %v165
    %199 = vmatprep.subr.bf16.mxu0 %v168
    %200 = vmatpush1.bf16.msra.mxu0 %v167
    %201 = vmatprep.subr.bf16.mxu0 %v170
    %202 = vmatpush1.bf16.msra.mxu0 %v169
    %203 = vmatprep.subr.bf16.mxu0 %v172
    %204 = vmatpush1.bf16.msra.mxu0 %v171
    %205 = vmatprep.subr.bf16.mxu0 %v174
    %206 = vmatpush1.bf16.msra.mxu0 %v173
    %207 = vmatprep.subr.bf16.mxu0 %v176
    %208 = vmatpush1.bf16.msra.mxu0 %v175
    %209 = vmatprep.subr.bf16.mxu0 %v178
    %210 = vmatpush1.bf16.msra.mxu0 %v177
    %211 = vmatprep.subr.bf16.mxu0 %v180
    %212 = vmatpush1.bf16.msra.mxu0 %v179
    %213 = vmatprep.subr.bf16.mxu0 0
    %214 = vmatpush1.bf16.msra.mxu0 0
    %215 = vmatprep.subr.bf16.mxu0 0
    %216 = vmatpush1.bf16.msra.mxu0 0
    %217 = vmatprep.subr.bf16.mxu0 0
    %218 = vmatpush1.bf16.msra.mxu0 0
    %219 = vmatprep.subr.bf16.mxu0 0
    %220 = vmatpush1.bf16.msra.mxu0 0
    %221 = vmatprep.subr.bf16.mxu0 0
    %222 = vmatpush1.bf16.msra.mxu0 0
    %223 = vmatprep.subr.bf16.mxu0 0
    %224 = vmatpush1.bf16.msra.mxu0 0
    %225 = vmatprep.subr.bf16.mxu0 0
    %226 = vmatpush1.bf16.msra.mxu0 0
    %227 = vmatprep.subr.bf16.mxu0 0
    %228 = vmatpush1.bf16.msra.mxu0 0
    %229 = vmatprep.mubr.bf16.mxu0 0
    %230 = vmatmul.mubr.bf16.gmra.mrb[0].mxu0 %v88
    %v231 = vpop.f32.mrb[0].mxu0
    %v232 = vadd.f32 %v110, %v231
    %v233 = vpop.f32.mrb[0].mxu0
    %v234 = vadd.f32 %v114, %v233
    %v235 = vpop.f32.mrb[0].mxu0
    %v236 = vpop.f32.mrb[0].mxu0
    %237 = vdwg.mxu0
    %v238 = vmax.f32 %v232, 0.0
    %v239 = vmax.f32 %v234, 0.0
    %v240 = vpack.c.bf16 %v238, %v238
    %v241 = vpack.c.bf16 %v239, %v239
    %v242 = vld [vmem:[#allocation4] sm:$0xff]
    %v243 = vld [vmem:[#allocation4 + $0x8] sm:$0xff]
    %v244 = vld [vmem:[#allocation4 + $0x10] sm:$0xff]
    %v245 = vld [vmem:[#allocation4 + $0x18] sm:$0xff]
    %v246 = vld [vmem:[#allocation4 + $0x20] sm:$0xff]
    %v247 = vld [vmem:[#allocation4 + $0x28] sm:$0xff]
    %v248 = vld [vmem:[#allocation4 + $0x30] sm:$0xff]
    %v249 = vld [vmem:[#allocation4 + $0x38] sm:$0xff]
    %v250 = vld [vmem:[#allocation4 + $0x40] sm:$0xff]
    %v251 = vld [vmem:[#allocation4 + $0x48] sm:$0xff]
    %v252 = vld [vmem:[#allocation4 + $0x50] sm:$0xff]
    %v253 = vld [vmem:[#allocation4 + $0x58] sm:$0xff]
    %v254 = vld [vmem:[#allocation4 + $0x60] sm:$0xff]
    %v255 = vld [vmem:[#allocation4 + $0x68] sm:$0xff]
    %v256 = vld [vmem:[#allocation4 + $0x70] sm:$0xff]
    %v257 = vld [vmem:[#allocation4 + $0x78] sm:$0xff]
    %v258 = vld [vmem:[#allocation4 + $0x80] sm:$0xff]
    %v259 = vld [vmem:[#allocation4 + $0x88] sm:$0xff]
    %v260 = vld [vmem:[#allocation4 + $0x90] sm:$0xff]
    %v261 = vld [vmem:[#allocation4 + $0x98] sm:$0xff]
    %v262 = vld [vmem:[#allocation4 + $0xa0] sm:$0xff]
    %v263 = vld [vmem:[#allocation4 + $0xa8] sm:$0xff]
    %v264 = vld [vmem:[#allocation4 + $0xb0] sm:$0xff]
    %v265 = vld [vmem:[#allocation4 + $0xb8] sm:$0xff]
    %v266 = vld [vmem:[#allocation4 + $0xc0] sm:$0xff]
    %v267 = vld [vmem:[#allocation4 + $0xc8] sm:$0xff]
    %v268 = vld [vmem:[#allocation4 + $0xd0] sm:$0xff]
    %v269 = vld [vmem:[#allocation4 + $0xd8] sm:$0xff]
    %v270 = vld [vmem:[#allocation4 + $0xe0] sm:$0xff]
    %v271 = vld [vmem:[#allocation4 + $0xe8] sm:$0xff]
    %v272 = vld [vmem:[#allocation4 + $0xf0] sm:$0xff]
    %v273 = vld [vmem:[#allocation4 + $0xf8] sm:$0xff]
    %v274 = vld [vmem:[%s4] sm:$0x3]
    %v276 = vlaneseq
    %v277 = vshrl.u32 %v276, 7
    %v278 = vsub.s32 0, %v277
    %v279 = vrot.slane %v274, %v278
    %v280 = vlaneseq
    %v281 = vshrl.u32 %v280, 7
    %v282 = vsub.s32 1, %v281
    %v283 = vrot.slane %v274, %v282
    %v318 = vunpack.c.l.b16 %v242
    %v319 = vunpack.c.h.b16 %v242
    %v320 = vunpack.c.l.b16 %v243
    %v321 = vunpack.c.h.b16 %v243
    %v322 = vunpack.c.l.b16 %v244
    %v323 = vunpack.c.h.b16 %v244
    %v324 = vunpack.c.l.b16 %v245
    %v325 = vunpack.c.h.b16 %v245
    %v326 = vunpack.c.l.b16 %v246
    %v327 = vunpack.c.h.b16 %v246
    %v328 = vunpack.c.l.b16 %v247
    %v329 = vunpack.c.h.b16 %v247
    %v330 = vunpack.c.l.b16 %v248
    %v331 = vunpack.c.h.b16 %v248
    %v332 = vunpack.c.l.b16 %v249
    %v333 = vunpack.c.h.b16 %v249
    %v334 = vunpack.c.l.b16 %v250
    %v335 = vunpack.c.h.b16 %v250
    %v336 = vunpack.c.l.b16 %v251
    %v337 = vunpack.c.h.b16 %v251
    %v338 = vunpack.c.l.b16 %v252
    %v339 = vunpack.c.h.b16 %v252
    %v340 = vunpack.c.l.b16 %v253
    %v341 = vunpack.c.h.b16 %v253
    %v342 = vunpack.c.l.b16 %v254
    %v343 = vunpack.c.h.b16 %v254
    %v344 = vunpack.c.l.b16 %v255
    %v345 = vunpack.c.h.b16 %v255
    %v346 = vunpack.c.l.b16 %v256
    %v347 = vunpack.c.h.b16 %v256
    %v348 = vunpack.c.l.b16 %v257
    %v349 = vunpack.c.h.b16 %v257
    %v350 = vunpack.c.l.b16 %v258
    %v351 = vunpack.c.h.b16 %v258
    %v352 = vunpack.c.l.b16 %v259
    %v353 = vunpack.c.h.b16 %v259
    %v354 = vunpack.c.l.b16 %v260
    %v355 = vunpack.c.h.b16 %v260
    %v356 = vunpack.c.l.b16 %v261
    %v357 = vunpack.c.h.b16 %v261
    %v358 = vunpack.c.l.b16 %v262
    %v359 = vunpack.c.h.b16 %v262
    %v360 = vunpack.c.l.b16 %v263
    %v361 = vunpack.c.h.b16 %v263
    %v362 = vunpack.c.l.b16 %v264
    %v363 = vunpack.c.h.b16 %v264
    %v364 = vunpack.c.l.b16 %v265
    %v365 = vunpack.c.h.b16 %v265
    %v366 = vunpack.c.l.b16 %v266
    %v367 = vunpack.c.h.b16 %v266
    %v368 = vunpack.c.l.b16 %v267
    %v369 = vunpack.c.h.b16 %v267
    %v370 = vunpack.c.l.b16 %v268
    %v371 = vunpack.c.h.b16 %v268
    %v372 = vunpack.c.l.b16 %v269
    %v373 = vunpack.c.h.b16 %v269
    %v374 = vunpack.c.l.b16 %v270
    %v375 = vunpack.c.h.b16 %v270
    %v376 = vunpack.c.l.b16 %v271
    %v377 = vunpack.c.h.b16 %v271
    %v378 = vunpack.c.l.b16 %v272
    %v379 = vunpack.c.h.b16 %v272
    %v380 = vunpack.c.l.b16 %v273
    %v381 = vunpack.c.h.b16 %v273
    %v382 = vpack.c.b16 %v320, %v318
    %v383 = vpack.c.b16 %v321, %v319
    %v384 = vpack.c.b16 %v324, %v322
    %v385 = vpack.c.b16 %v325, %v323
    %v386 = vpack.c.b16 %v328, %v326
    %v387 = vpack.c.b16 %v329, %v327
    %v388 = vpack.c.b16 %v332, %v330
    %v389 = vpack.c.b16 %v333, %v331
    %v390 = vpack.c.b16 %v336, %v334
    %v391 = vpack.c.b16 %v337, %v335
    %v392 = vpack.c.b16 %v340, %v338
    %v393 = vpack.c.b16 %v341, %v339
    %v394 = vpack.c.b16 %v344, %v342
    %v395 = vpack.c.b16 %v345, %v343
    %v396 = vpack.c.b16 %v348, %v346
    %v397 = vpack.c.b16 %v349, %v347
    %v398 = vpack.c.b16 %v352, %v350
    %v399 = vpack.c.b16 %v353, %v351
    %v400 = vpack.c.b16 %v356, %v354
    %v401 = vpack.c.b16 %v357, %v355
    %v402 = vpack.c.b16 %v360, %v358
    %v403 = vpack.c.b16 %v361, %v359
    %v404 = vpack.c.b16 %v364, %v362
    %v405 = vpack.c.b16 %v365, %v363
    %v406 = vpack.c.b16 %v368, %v366
    %v407 = vpack.c.b16 %v369, %v367
    %v408 = vpack.c.b16 %v372, %v370
    %v409 = vpack.c.b16 %v373, %v371
    %v410 = vpack.c.b16 %v376, %v374
    %v411 = vpack.c.b16 %v377, %v375
    %v412 = vpack.c.b16 %v380, %v378
    %v413 = vpack.c.b16 %v381, %v379
    %446 = vmatprep.subr.bf16.mxu0 %v383
    %447 = vmatpush1.bf16.msra.mxu0 %v382
    %448 = vmatprep.subr.bf16.mxu0 %v385
    %449 = vmatpush1.bf16.msra.mxu0 %v384
    %450 = vmatprep.subr.bf16.mxu0 %v387
    %451 = vmatpush1.bf16.msra.mxu0 %v386
    %452 = vmatprep.subr.bf16.mxu0 %v389
    %453 = vmatpush1.bf16.msra.mxu0 %v388
    %454 = vmatprep.subr.bf16.mxu0 %v391
    %455 = vmatpush1.bf16.msra.mxu0 %v390
    %456 = vmatprep.subr.bf16.mxu0 %v393
    %457 = vmatpush1.bf16.msra.mxu0 %v392
    %458 = vmatprep.subr.bf16.mxu0 %v395
    %459 = vmatpush1.bf16.msra.mxu0 %v394
    %460 = vmatprep.subr.bf16.mxu0 %v397
    %461 = vmatpush1.bf16.msra.mxu0 %v396
    %462 = vmatprep.subr.bf16.mxu0 %v399
    %463 = vmatpush1.bf16.msra.mxu0 %v398
    %464 = vmatprep.subr.bf16.mxu0 %v401
    %465 = vmatpush1.bf16.msra.mxu0 %v400
    %466 = vmatprep.subr.bf16.mxu0 %v403
    %467 = vmatpush1.bf16.msra.mxu0 %v402
    %468 = vmatprep.subr.bf16.mxu0 %v405
    %469 = vmatpush1.bf16.msra.mxu0 %v404
    %470 = vmatprep.subr.bf16.mxu0 %v407
    %471 = vmatpush1.bf16.msra.mxu0 %v406
    %472 = vmatprep.subr.bf16.mxu0 %v409
    %473 = vmatpush1.bf16.msra.mxu0 %v408
    %474 = vmatprep.subr.bf16.mxu0 %v411
    %475 = vmatpush1.bf16.msra.mxu0 %v410
    %476 = vmatprep.subr.bf16.mxu0 %v413
    %477 = vmatpush1.bf16.msra.mxu0 %v412
    %478 = vmatprep.mubr.bf16.mxu0 %v241
    %479 = vmatmul.mubr.bf16.gmra.mrb[0].mxu0 %v240
    %v480 = vpop.f32.mrb[0].mxu0
    %v481 = vadd.f32 %v279, %v480
    %v482 = vpop.f32.mrb[0].mxu0
    %v483 = vadd.f32 %v283, %v482
    %v484 = vpop.f32.mrb[0].mxu0
    %v485 = vpop.f32.mrb[0].mxu0
    %486 = vdwg.mxu0
    %v487 = vmax.f32 %v481, 0.0
    %v488 = vmax.f32 %v483, 0.0
    %v489 = vpack.c.bf16 %v487, %v487
    %v490 = vpack.c.bf16 %v488, %v488
    %v491 = vld [vmem:[#allocation6] sm:$0xf]
    %v492 = vld [vmem:[#allocation6 + $0x4] sm:$0xf]
    %v493 = vld [vmem:[#allocation6 + $0x8] sm:$0xf]
    %v494 = vld [vmem:[#allocation6 + $0xc] sm:$0xf]
    %v495 = vld [vmem:[#allocation6 + $0x10] sm:$0xf]
    %v496 = vld [vmem:[#allocation6 + $0x14] sm:$0xf]
    %v497 = vld [vmem:[#allocation6 + $0x18] sm:$0xf]
    %v498 = vld [vmem:[#allocation6 + $0x1c] sm:$0xf]
    %v499 = vld [vmem:[#allocation6 + $0x20] sm:$0xf]
    %v500 = vld [vmem:[#allocation6 + $0x24] sm:$0xf]
    %v501 = vld [vmem:[#allocation6 + $0x28] sm:$0xf]
    %v502 = vld [vmem:[#allocation6 + $0x2c] sm:$0xf]
    %v503 = vld [vmem:[#allocation6 + $0x30] sm:$0xf]
    %v504 = vld [vmem:[#allocation6 + $0x34] sm:$0xf]
    %v505 = vld [vmem:[#allocation6 + $0x38] sm:$0xf]
    %v506 = vld [vmem:[#allocation6 + $0x3c] sm:$0xf]
    %v507 = vld [vmem:[#allocation6 + $0x40] sm:$0xf]
    %v508 = vld [vmem:[#allocation6 + $0x44] sm:$0xf]
    %v509 = vld [vmem:[#allocation6 + $0x48] sm:$0xf]
    %v510 = vld [vmem:[#allocation6 + $0x4c] sm:$0xf]
    %v511 = vld [vmem:[#allocation6 + $0x50] sm:$0xf]
    %v512 = vld [vmem:[#allocation6 + $0x54] sm:$0xf]
    %v513 = vld [vmem:[#allocation6 + $0x58] sm:$0xf]
    %v514 = vld [vmem:[#allocation6 + $0x5c] sm:$0xf]
    %v515 = vld [vmem:[#allocation6 + $0x60] sm:$0xf]
    %v516 = vld [vmem:[#allocation6 + $0x64] sm:$0xf]
    %v517 = vld [vmem:[#allocation6 + $0x68] sm:$0xf]
    %v518 = vld [vmem:[#allocation6 + $0x6c] sm:$0xf]
    %v519 = vld [vmem:[#allocation6 + $0x70] sm:$0xf]
    %v520 = vld [vmem:[#allocation6 + $0x74] sm:$0xf]
    %v521 = vld [vmem:[#allocation6 + $0x78] sm:$0xf]
    %v522 = vld [vmem:[#allocation6 + $0x7c] sm:$0xf]
    %v523 = vld [vmem:[%s6] sm:$0x1]
    %v525 = vlaneseq
    %v526 = vshrl.u32 %v525, 7
    %v527 = vsub.s32 0, %v526
    %v528 = vrot.slane %v523, %v527
    %v562 = vunpack.c.l.b16 %v491
    %v563 = vunpack.c.l.b16 %v492
    %v564 = vunpack.c.l.b16 %v493
    %v565 = vunpack.c.l.b16 %v494
    %v566 = vunpack.c.l.b16 %v495
    %v567 = vunpack.c.l.b16 %v496
    %v568 = vunpack.c.l.b16 %v497
    %v569 = vunpack.c.l.b16 %v498
    %v570 = vunpack.c.l.b16 %v499
    %v571 = vunpack.c.l.b16 %v500
    %v572 = vunpack.c.l.b16 %v501
    %v573 = vunpack.c.l.b16 %v502
    %v574 = vunpack.c.l.b16 %v503
    %v575 = vunpack.c.l.b16 %v504
    %v576 = vunpack.c.l.b16 %v505
    %v577 = vunpack.c.l.b16 %v506
    %v578 = vunpack.c.l.b16 %v507
    %v579 = vunpack.c.l.b16 %v508
    %v580 = vunpack.c.l.b16 %v509
    %v581 = vunpack.c.l.b16 %v510
    %v582 = vunpack.c.l.b16 %v511
    %v583 = vunpack.c.l.b16 %v512
    %v584 = vunpack.c.l.b16 %v513
    %v585 = vunpack.c.l.b16 %v514
    %v586 = vunpack.c.l.b16 %v515
    %v587 = vunpack.c.l.b16 %v516
    %v588 = vunpack.c.l.b16 %v517
    %v589 = vunpack.c.l.b16 %v518
    %v590 = vunpack.c.l.b16 %v519
    %v591 = vunpack.c.l.b16 %v520
    %v592 = vunpack.c.l.b16 %v521
    %v593 = vunpack.c.l.b16 %v522
    %v594 = vpack.c.b16 %v563, %v562
    %v595 = vpack.c.b16 %v565, %v564
    %v596 = vpack.c.b16 %v567, %v566
    %v597 = vpack.c.b16 %v569, %v568
    %v598 = vpack.c.b16 %v571, %v570
    %v599 = vpack.c.b16 %v573, %v572
    %v600 = vpack.c.b16 %v575, %v574
    %v601 = vpack.c.b16 %v577, %v576
    %v602 = vpack.c.b16 %v579, %v578
    %v603 = vpack.c.b16 %v581, %v580
    %v604 = vpack.c.b16 %v583, %v582
    %v605 = vpack.c.b16 %v585, %v584
    %v606 = vpack.c.b16 %v587, %v586
    %v607 = vpack.c.b16 %v589, %v588
    %v608 = vpack.c.b16 %v591, %v590
    %v609 = vpack.c.b16 %v593, %v592
    %626 = vmatprep.subr.bf16.mxu0 0
    %627 = vmatpush1.bf16.msra.mxu0 %v594
    %628 = vmatprep.subr.bf16.mxu0 0
    %629 = vmatpush1.bf16.msra.mxu0 %v595
    %630 = vmatprep.subr.bf16.mxu0 0
    %631 = vmatpush1.bf16.msra.mxu0 %v596
    %632 = vmatprep.subr.bf16.mxu0 0
    %633 = vmatpush1.bf16.msra.mxu0 %v597
    %634 = vmatprep.subr.bf16.mxu0 0
    %635 = vmatpush1.bf16.msra.mxu0 %v598
    %636 = vmatprep.subr.bf16.mxu0 0
    %637 = vmatpush1.bf16.msra.mxu0 %v599
    %638 = vmatprep.subr.bf16.mxu0 0
    %639 = vmatpush1.bf16.msra.mxu0 %v600
    %640 = vmatprep.subr.bf16.mxu0 0
    %641 = vmatpush1.bf16.msra.mxu0 %v601
    %642 = vmatprep.subr.bf16.mxu0 0
    %643 = vmatpush1.bf16.msra.mxu0 %v602
    %644 = vmatprep.subr.bf16.mxu0 0
    %645 = vmatpush1.bf16.msra.mxu0 %v603
    %646 = vmatprep.subr.bf16.mxu0 0
    %647 = vmatpush1.bf16.msra.mxu0 %v604
    %648 = vmatprep.subr.bf16.mxu0 0
    %649 = vmatpush1.bf16.msra.mxu0 %v605
    %650 = vmatprep.subr.bf16.mxu0 0
    %651 = vmatpush1.bf16.msra.mxu0 %v606
    %652 = vmatprep.subr.bf16.mxu0 0
    %653 = vmatpush1.bf16.msra.mxu0 %v607
    %654 = vmatprep.subr.bf16.mxu0 0
    %655 = vmatpush1.bf16.msra.mxu0 %v608
    %656 = vmatprep.subr.bf16.mxu0 0
    %657 = vmatpush1.bf16.msra.mxu0 %v609
    %658 = vmatprep.mubr.bf16.mxu0 %v490
    %659 = vmatmul.mubr.bf16.gmra.mrb[0].mxu0 %v489
    %v660 = vpop.f32.mrb[0].mxu0
    %v661 = vadd.f32 %v528, %v660
    %v662 = vpop.f32.mrb[0].mxu0
    %v663 = vpop.f32.mrb[0].mxu0
    %v664 = vpop.f32.mrb[0].mxu0
    %665 = vdwg.mxu0
    %v666 = vmax.f32 %v661, 0.0
    %v667 = vpack.c.bf16 %v666, %v666
    %v668 = vld [vmem:[#allocation7] sm:$0xf]
    %v669 = vld [vmem:[#allocation7 + $0x4] sm:$0xf]
    %v670 = vld [vmem:[#allocation7 + $0x8] sm:$0xf]
    %v671 = vld [vmem:[#allocation7 + $0xc] sm:$0xf]
    %v672 = vld [vmem:[#allocation7 + $0x10] sm:$0xf]
    %v673 = vld [vmem:[#allocation7 + $0x14] sm:$0xf]
    %v674 = vld [vmem:[#allocation7 + $0x18] sm:$0xf]
    %v675 = vld [vmem:[#allocation7 + $0x1c] sm:$0xf]
    %v676 = vld [vmem:[#allocation7 + $0x20] sm:$0xf]
    %v677 = vld [vmem:[#allocation7 + $0x24] sm:$0xf]
    %v678 = vld [vmem:[#allocation7 + $0x28] sm:$0xf]
    %v679 = vld [vmem:[#allocation7 + $0x2c] sm:$0xf]
    %v680 = vld [vmem:[#allocation7 + $0x30] sm:$0xf]
    %v681 = vld [vmem:[#allocation7 + $0x34] sm:$0xf]
    %v682 = vld [vmem:[#allocation7 + $0x38] sm:$0xf]
    %v683 = vld [vmem:[#allocation7 + $0x3c] sm:$0xf]
    %v684 = vld [vmem:[%s8] sm:$0x1]
    %v686 = vlaneseq
    %v687 = vshrl.u32 %v686, 7
    %v688 = vsub.s32 0, %v687
    %v689 = vrot.slane %v684, %v688
    %v707 = vunpack.c.l.b16 %v668
    %v708 = vunpack.c.l.b16 %v669
    %v709 = vunpack.c.l.b16 %v670
    %v710 = vunpack.c.l.b16 %v671
    %v711 = vunpack.c.l.b16 %v672
    %v712 = vunpack.c.l.b16 %v673
    %v713 = vunpack.c.l.b16 %v674
    %v714 = vunpack.c.l.b16 %v675
    %v715 = vunpack.c.l.b16 %v676
    %v716 = vunpack.c.l.b16 %v677
    %v717 = vunpack.c.l.b16 %v678
    %v718 = vunpack.c.l.b16 %v679
    %v719 = vunpack.c.l.b16 %v680
    %v720 = vunpack.c.l.b16 %v681
    %v721 = vunpack.c.l.b16 %v682
    %v722 = vunpack.c.l.b16 %v683
    %v723 = vpack.c.b16 %v708, %v707
    %v724 = vpack.c.b16 %v710, %v709
    %v725 = vpack.c.b16 %v712, %v711
    %v726 = vpack.c.b16 %v714, %v713
    %v727 = vpack.c.b16 %v716, %v715
    %v728 = vpack.c.b16 %v718, %v717
    %v729 = vpack.c.b16 %v720, %v719
    %v730 = vpack.c.b16 %v722, %v721
    %739 = vmatprep.subr.bf16.mxu0 0
    %740 = vmatpush1.bf16.msra.mxu0 %v723
    %741 = vmatprep.subr.bf16.mxu0 0
    %742 = vmatpush1.bf16.msra.mxu0 %v724
    %743 = vmatprep.subr.bf16.mxu0 0
    %744 = vmatpush1.bf16.msra.mxu0 %v725
    %745 = vmatprep.subr.bf16.mxu0 0
    %746 = vmatpush1.bf16.msra.mxu0 %v726
    %747 = vmatprep.subr.bf16.mxu0 0
    %748 = vmatpush1.bf16.msra.mxu0 %v727
    %749 = vmatprep.subr.bf16.mxu0 0
    %750 = vmatpush1.bf16.msra.mxu0 %v728
    %751 = vmatprep.subr.bf16.mxu0 0
    %752 = vmatpush1.bf16.msra.mxu0 %v729
    %753 = vmatprep.subr.bf16.mxu0 0
    %754 = vmatpush1.bf16.msra.mxu0 %v730
    %755 = vmatprep.subr.bf16.mxu0 0
    %756 = vmatpush1.bf16.msra.mxu0 0
    %757 = vmatprep.subr.bf16.mxu0 0
    %758 = vmatpush1.bf16.msra.mxu0 0
    %759 = vmatprep.subr.bf16.mxu0 0
    %760 = vmatpush1.bf16.msra.mxu0 0
    %761 = vmatprep.subr.bf16.mxu0 0
    %762 = vmatpush1.bf16.msra.mxu0 0
    %763 = vmatprep.subr.bf16.mxu0 0
    %764 = vmatpush1.bf16.msra.mxu0 0
    %765 = vmatprep.subr.bf16.mxu0 0
    %766 = vmatpush1.bf16.msra.mxu0 0
    %767 = vmatprep.subr.bf16.mxu0 0
    %768 = vmatpush1.bf16.msra.mxu0 0
    %769 = vmatprep.subr.bf16.mxu0 0
    %770 = vmatpush1.bf16.msra.mxu0 0
    %771 = vmatprep.mubr.bf16.mxu0 0
    %772 = vmatmul.mubr.bf16.gmra.mrb[0].mxu0 %v667
    %v773 = vpop.f32.mrb[0].mxu0
    %v774 = vadd.f32 %v689, %v773
    %v775 = vpop.f32.mrb[0].mxu0
    %v776 = vpop.f32.mrb[0].mxu0
    %v777 = vpop.f32.mrb[0].mxu0
    %778 = vdwg.mxu0
    %779 = vst [vmem:[%s9] sm:$0xff] %v774
    // Predicated region
    $region54: #{dqn_forward.1} parent=1 // pred_check
      _
    $region55: #{dqn_forward.1} parent=1 // pred_check_branch
      %781 = sbr.rel (0) target = $region57
    $region56: #{dqn_forward.1} parent=1 // pred_region
      _
    $region57: #{dqn_forward.1} parent=1 // pred_fallthru
      _
    // Predicated region
    $region58: #{dqn_forward.1} parent=1 // pred_check
      _
    $region59: #{dqn_forward.1} parent=1 // pred_check_branch
      %783 = sbr.rel (0) target = $region61
    $region60: #{dqn_forward.1} parent=1 // pred_region
      _
    $region61: #{dqn_forward.1} parent=1 // pred_fallthru
      _
    %784 = vsyncpa [#allocation3], 1
    %785 = vsyncpa [#allocation5], 1
    %786 = vsyncpa [#allocation8], 1

</llo_original>
